<compile_context>
chip_gen: v5e
topology: v5e:2x2
jax: 0.10.0
libtpu: 0.0.40
codegen_flags: <defaults>
</compile_context>

<pallas_src>
import jax
import jax.numpy as jnp
from jax.experimental import pallas as pl
from jax.experimental.pallas import tpu as pltpu


def _round_up(a: int, b: int) -> int:
    return (a + b - 1) // b * b


# --------------------------------------------------------------------------- #
# Kernel
# --------------------------------------------------------------------------- #
def attention_pooling_kernel(idx_row_ref, w_row_ref, x_ref, wmt_ref, out_ref):
    """One node tile: msg = x @ Wm^T; out += weighted_segment_mask @ msg."""
    i = pl.program_id(1)  # node-tile index within this core (reduction axis)

    @pl.when(i == 0)
    def _init():
        out_ref[...] = jnp.zeros_like(out_ref)

    x = x_ref[...]                                           # (TN, D_pad) bf16
    # message_nn(x) without bias (bias is deferred to the XLA epilogue).
    msg = jnp.dot(x, wmt_ref[...],
                  preferred_element_type=jnp.float32)        # (TN, Do_pad) f32

    s_pad = out_ref.shape[0]
    tn = x.shape[0]
    # Weighted segment mask built in-kernel: mask[s, n] = w_n if index_n == s.
    rows = jax.lax.broadcasted_iota(jnp.int32, (s_pad, tn), 0)
    wmask = jnp.where(rows == idx_row_ref[...], w_row_ref[...],
                      jnp.float32(0.0)).astype(jnp.bfloat16)  # (S_pad, TN)

    out_ref[...] += jnp.dot(wmask, msg.astype(jnp.bfloat16),
                            preferred_element_type=jnp.float32)  # (S_pad, Do_pad)


# --------------------------------------------------------------------------- #
# VMEM budgeting / tile selection
# --------------------------------------------------------------------------- #
def _vmem_budget_bytes(tn: int, d_pad: int, do_pad: int, s_pad: int) -> int:
    x_tile = 2 * tn * d_pad * 2          # double-buffered bf16 x tile
    wmt = 2 * d_pad * do_pad * 2         # resident Wm^T (bf16), budget 2 buffers
    out_blk = 2 * s_pad * do_pad * 4     # resident f32 accumulator block
    rows = 2 * 2 * 8 * tn * 4            # idx/w (1, TN) rows (8-sublane padded)
    interm = tn * do_pad * (4 + 2)       # f32 msg + its bf16 copy
    return x_tile + wmt + out_blk + rows + interm


def _select_node_tile(n: int, d_pad: int, do_pad: int, s_pad: int, budget: int) -> int:
    # Prefer 256-multiples: v6e/v7x MXUs are 2x256^2 (128-wide tiles feed them at
    # half width); v5e's 4x128^2 is fine with 256 too.
    upper = max(256, min(1024, _round_up(n, 256)))
    for cand in (1024, 512, 256, 128):
        if cand <= upper and _vmem_budget_bytes(cand, d_pad, do_pad, s_pad) <= budget:
            return cand
    return 128


# --------------------------------------------------------------------------- #
# Wrapper
# --------------------------------------------------------------------------- #
def attention_pooling(x, index, num_segments, wg, bg, wm, bm,
                      *, node_tile=None, core_split=1):
    """AttentionPooling forward: softmax(gate_nn(x)) per segment, pooling message_nn(x)."""
    N, D = x.shape
    S = int(num_segments)
    D_out = wm.shape[0]

    x = x.astype(jnp.float32)
    idx = index.astype(jnp.int32)

    # ---- XLA prepass (two-pass softmax): gate GEMV + segment statistics -----
    gate = x @ wg.reshape(D, 1).astype(jnp.float32) + bg.reshape(1, 1).astype(jnp.float32)
    seg_max = jax.ops.segment_max(gate, idx, num_segments=S)          # (S, 1)
    e = jnp.exp(gate - seg_max[idx])                                   # (N, 1)
    seg_sum = jax.ops.segment_sum(e, idx, num_segments=S)              # (S, 1)
    inv = 1.0 / (seg_sum + 1e-10)
    w = (e * inv[idx]).reshape(-1)                                     # (N,)  normalized weights
    wsum = seg_sum * inv                                               # (S, 1) = l / (l + eps)

    # ---- TPU-friendly padded shapes -----------------------------------------
    D_pad = _round_up(max(D, 128), 128)
    Do_pad = _round_up(max(D_out, 128), 128)
    S_pad = _round_up(max(S, 8), 8)

    try:
        vmem_cap = int(pltpu.get_tpu_info().vmem_capacity_bytes)
    except Exception:                       # conservative fallback: v7x = 64 MiB / TC
        vmem_cap = 64 * 1024 * 1024
    tile_budget = int(vmem_cap * 0.6)

    if node_tile is None:
        node_tile = _select_node_tile(N, D_pad, Do_pad, S_pad, tile_budget)
    TN = int(node_tile)
    assert TN % 128 == 0
    # TODO(synk): if Wm^T alone (D_pad*Do_pad bf16) cannot fit the VMEM budget
    # (very large D), reintroduce a D-output-column grid axis with the largest
    # column tile that fits.

    C = max(1, int(core_split))
    N_pad = _round_up(N, TN * C)
    TPC = N_pad // (TN * C)                 # node tiles per core

    # ---- pad + pack inputs (bf16 cast fused with the pad; skip when aligned) -
    xp = x.astype(jnp.bfloat16)
    if (N_pad, D_pad) != (N, D):
        xp = jnp.pad(xp, ((0, N_pad - N), (0, D_pad - D)))
    idx_row = jnp.pad(idx, (0, N_pad - N)).reshape(1, N_pad)       # padded nodes: w == 0
    w_row = jnp.pad(w, (0, N_pad - N)).reshape(1, N_pad).astype(jnp.float32)
    wmt = wm.T.astype(jnp.float32)                                 # (D, D_out)
    if (D_pad, Do_pad) != (D, D_out):
        wmt = jnp.pad(wmt, ((0, D_pad - D), (0, Do_pad - D_out)))
    wmt = wmt.astype(jnp.bfloat16)

    used = _vmem_budget_bytes(TN, D_pad, Do_pad, S_pad)
    vmem_limit = int(min(max(used * 1.25 + 2 * 1024 * 1024, 24 * 1024 * 1024),
                         vmem_cap * 0.85))

    grid = (C, TPC)   # (core split: parallel, node tiles: reduction/arbitrary)

    grid_spec = pltpu.PrefetchScalarGridSpec(
        num_scalar_prefetch=0,
        grid=grid,
        in_specs=[
            pl.BlockSpec((1, TN), lambda c, i: (0, c * TPC + i)),       # index row
            pl.BlockSpec((1, TN), lambda c, i: (0, c * TPC + i)),       # softmax weight row
            # If profiling shows exposed DMA at node-tile boundaries, try
            # pipeline_mode=pl.Buffered(3) on this x BlockSpec.
            pl.BlockSpec((TN, D_pad), lambda c, i: (c * TPC + i, 0)),   # x tile (bf16)
            pl.BlockSpec((D_pad, Do_pad), lambda c, i: (0, 0)),         # resident Wm^T (bf16)
        ],
        out_specs=pl.BlockSpec((None, S_pad, Do_pad), lambda c, i: (c, 0, 0)),
    )

    partials = pl.pallas_call(
        attention_pooling_kernel,
        out_shape=jax.ShapeDtypeStruct((C, S_pad, Do_pad), jnp.float32),
        grid_spec=grid_spec,
        compiler_params=pltpu.CompilerParams(
            dimension_semantics=("parallel", "arbitrary"),
            vmem_limit_bytes=vmem_limit,
        ),
    )(idx_row, w_row, xp, wmt)

    # Tiny epilogue: combine per-core partial sums and add the deferred bias.
    pooled = partials.sum(axis=0)[:S, :D_out]
    return pooled + wsum * bm.reshape(1, D_out).astype(jnp.float32)


# --------------------------------------------------------------------------- #
# Pure-JAX reference (mirrors the PyTorch forward exactly, all f32)
# --------------------------------------------------------------------------- #
def attention_pooling_ref(x, index, num_segments, wg, bg, wm, bm):
    gate = x @ wg.T + bg                                            # (N, 1)
    seg_max = jax.ops.segment_max(gate, index, num_segments=num_segments)
    gate = gate - seg_max[index]
    gate = jnp.exp(gate)
    seg_sum = jax.ops.segment_sum(gate, index, num_segments=num_segments)
    gate = gate / (seg_sum[index] + 1e-10)
    msg = x @ wm.T + bm                                             # (N, D_out)
    return jax.ops.segment_sum(gate * msg, index, num_segments=num_segments)


if __name__ == "__main__":
    # Small but unaligned shapes: 600 nodes, 160 features, 10 segments.
    N, D, S = 600, 160, 10

    key = jax.random.PRNGKey(0)
    kx, ki, kwg, kbg, kwm, kbm = jax.random.split(key, 6)

    x = jax.random.normal(kx, (N, D), dtype=jnp.float32)
    index = jax.random.randint(ki, (N,), 0, S, dtype=jnp.int32)

    # gate_nn = Linear(D, 1), message_nn = Linear(D, D) -- deterministic init
    wg = jax.random.normal(kwg, (1, D), dtype=jnp.float32) * 0.1
    bg = jax.random.normal(kbg, (1,), dtype=jnp.float32) * 0.1
    wm = jax.random.normal(kwm, (D, D), dtype=jnp.float32) * 0.1
    bm = jax.random.normal(kbm, (D,), dtype=jnp.float32) * 0.1

    # node_tile=256 (256-wide MXU feed) + core_split=2 so the demo exercises
    # multiple node tiles per core AND the per-core partial-sum path.
    out = attention_pooling(x, index, S, wg, bg, wm, bm, node_tile=256, core_split=2)
    out = jax.block_until_ready(out)

    ref = attention_pooling_ref(x, index, S, wg, bg, wm, bm)
    assert out.shape == (S, D)
    # bf16 MXU operands (f32 accumulation) -> tolerance looser than pure f32.
    max_err = jnp.max(jnp.abs(out - ref))
    assert jnp.allclose(out, ref, atol=3e-2, rtol=3e-2), max_err

    print("KERNEL_OK")
</pallas_src>

<mosaic_0001>
module attributes {stable_mosaic.version = 11 : i64} {
  func.func @attention_pooling_kernel(%arg0: i32, %arg1: i32, %arg2: memref<1x256xi32, #tpu.memory_space<vmem>>, %arg3: memref<1x256xf32, #tpu.memory_space<vmem>>, %arg4: memref<256x256xbf16, #tpu.memory_space<vmem>>, %arg5: memref<256x256xbf16, #tpu.memory_space<vmem>>, %arg6: memref<1x16x256xf32, #tpu.memory_space<vmem>>) attributes {dimension_semantics = [#tpu.dimension_semantics<parallel>, #tpu.dimension_semantics<arbitrary>], iteration_bounds = array<i64: 2, 2>, scalar_prefetch = 0 : i64, scratch_operands = 0 : i64, tpu.core_type = #tpu.core_type<tc>, window_params = [{transform_indices = @transform_0, window_bounds = array<i64: 1, 256>}, {transform_indices = @transform_1, window_bounds = array<i64: 1, 256>}, {transform_indices = @transform_2, window_bounds = array<i64: 256, 256>}, {pipeline_mode = #tpu.pipeline_mode<synchronous>, transform_indices = @transform_3, window_bounds = array<i64: 256, 256>}, {transform_indices = @transform_4, window_bounds = array<i64: 1, 16, 256>}]} {
    %c0_i32 = arith.constant 0 : i32
    %0 = arith.cmpi eq, %arg1, %c0_i32 : i32
    %1 = arith.extui %0 : i1 to i32
    %c0_i32_0 = arith.constant 0 : i32
    %2 = arith.cmpi ne, %1, %c0_i32_0 : i32
    scf.if %2 {
      %cst_16 = arith.constant 0.000000e+00 : f32
      %24 = vector.broadcast %cst_16 : f32 to vector<16x256xf32>
      %c0_17 = arith.constant 0 : index
      %c0_18 = arith.constant 0 : index
      %c0_19 = arith.constant 0 : index
      %25 = vector.load %arg6[%c0_17, %c0_18, %c0_19] : memref<1x16x256xf32, #tpu.memory_space<vmem>>, vector<1x16x256xf32>
      %26 = vector.shape_cast %25 : vector<1x16x256xf32> to vector<16x256xf32>
      %27 = vector.shape_cast %24 : vector<16x256xf32> to vector<1x16x256xf32>
      tpu.vector_store %arg6[%c0_17, %c0_18, %c0_19], %27 {strides = array<i32>} : memref<1x16x256xf32, #tpu.memory_space<vmem>>, vector<1x16x256xf32>,
    } else {
    }
    %c0 = arith.constant 0 : index
    %c0_1 = arith.constant 0 : index
    %3 = vector.load %arg4[%c0, %c0_1] : memref<256x256xbf16, #tpu.memory_space<vmem>>, vector<256x256xbf16>
    %c0_2 = arith.constant 0 : index
    %c0_3 = arith.constant 0 : index
    %4 = vector.load %arg5[%c0_2, %c0_3] : memref<256x256xbf16, #tpu.memory_space<vmem>>, vector<256x256xbf16>
    %cst = arith.constant dense<0.000000e+00> : vector<256x256xf32>
    %5 = tpu.matmul %3, %4, %cst {dimension_numbers = #tpu.dot_dimension_numbers<[1], [0], [0], [1], [0, 0, 1, 1], [], []>} : vector<256x256xbf16>, vector<256x256xbf16>, vector<256x256xf32> -> vector<256x256xf32>
    %6 = tpu.iota {dimensions = array<i32: 0>} : vector<16x256xi32>
    %c0_4 = arith.constant 0 : index
    %c0_5 = arith.constant 0 : index
    %7 = vector.load %arg2[%c0_4, %c0_5] : memref<1x256xi32, #tpu.memory_space<vmem>>, vector<1x256xi32>
    %8 = vector.broadcast %7 : vector<1x256xi32> to vector<16x256xi32>
    %9 = arith.cmpi eq, %6, %8 : vector<16x256xi32>
    %c0_6 = arith.constant 0 : index
    %c0_7 = arith.constant 0 : index
    %10 = vector.load %arg3[%c0_6, %c0_7] : memref<1x256xf32, #tpu.memory_space<vmem>>, vector<1x256xf32>
    %cst_8 = arith.constant 0.000000e+00 : f32
    %11 = vector.shape_cast %10 : vector<1x256xf32> to vector<1x256xf32>
    %12 = vector.broadcast %11 : vector<1x256xf32> to vector<16x256xf32>
    %13 = vector.broadcast %cst_8 : f32 to vector<16x256xf32>
    %14 = arith.select %9, %12, %13 : vector<16x256xi1>, vector<16x256xf32>
    %15 = arith.truncf %14 : vector<16x256xf32> to vector<16x256xbf16>
    %c0_9 = arith.constant 0 : index
    %c0_10 = arith.constant 0 : index
    %c0_11 = arith.constant 0 : index
    %16 = vector.load %arg6[%c0_9, %c0_10, %c0_11] : memref<1x16x256xf32, #tpu.memory_space<vmem>>, vector<1x16x256xf32>
    %17 = vector.shape_cast %16 : vector<1x16x256xf32> to vector<16x256xf32>
    %18 = arith.truncf %5 : vector<256x256xf32> to vector<256x256xbf16>
    %cst_12 = arith.constant dense<0.000000e+00> : vector<16x256xf32>
    %19 = tpu.matmul %15, %18, %cst_12 {dimension_numbers = #tpu.dot_dimension_numbers<[1], [0], [0], [1], [0, 0, 1, 1], [], []>} : vector<16x256xbf16>, vector<256x256xbf16>, vector<16x256xf32> -> vector<16x256xf32>
    %20 = arith.addf %17, %19 : vector<16x256xf32>
    %c0_13 = arith.constant 0 : index
    %c0_14 = arith.constant 0 : index
    %c0_15 = arith.constant 0 : index
    %21 = vector.load %arg6[%c0_13, %c0_14, %c0_15] : memref<1x16x256xf32, #tpu.memory_space<vmem>>, vector<1x16x256xf32>
    %22 = vector.shape_cast %21 : vector<1x16x256xf32> to vector<16x256xf32>
    %23 = vector.shape_cast %20 : vector<16x256xf32> to vector<1x16x256xf32>
    tpu.vector_store %arg6[%c0_13, %c0_14, %c0_15], %23 {strides = array<i32>} : memref<1x16x256xf32, #tpu.memory_space<vmem>>, vector<1x16x256xf32>,
    return
  }
  func.func @transform_0(%arg0: i32, %arg1: i32) -> (i32, i32) {
    %c2_i32 = arith.constant 2 : i32
    %0 = arith.muli %arg0, %c2_i32 : i32
    %1 = arith.addi %0, %arg1 : i32
    %c0_i32 = arith.constant 0 : i32
    %c0_i32_0 = arith.constant 0 : i32
    return %c0_i32, %1 : i32, i32
  }
  func.func @transform_1(%arg0: i32, %arg1: i32) -> (i32, i32) {
    %c2_i32 = arith.constant 2 : i32
    %0 = arith.muli %arg0, %c2_i32 : i32
    %1 = arith.addi %0, %arg1 : i32
    %c0_i32 = arith.constant 0 : i32
    %c0_i32_0 = arith.constant 0 : i32
    return %c0_i32, %1 : i32, i32
  }
  func.func @transform_2(%arg0: i32, %arg1: i32) -> (i32, i32) {
    %c2_i32 = arith.constant 2 : i32
    %0 = arith.muli %arg0, %c2_i32 : i32
    %1 = arith.addi %0, %arg1 : i32
    %c0_i32 = arith.constant 0 : i32
    %c0_i32_0 = arith.constant 0 : i32
    return %1, %c0_i32 : i32, i32
  }
  func.func @transform_3(%arg0: i32, %arg1: i32) -> (i32, i32) {
    %c0_i32 = arith.constant 0 : i32
    %c0_i32_0 = arith.constant 0 : i32
    %c0_i32_1 = arith.constant 0 : i32
    return %c0_i32, %c0_i32_0 : i32, i32
  }
  func.func @transform_4(%arg0: i32, %arg1: i32) -> (i32, i32, i32) {
    %c0_i32 = arith.constant 0 : i32
    %c0_i32_0 = arith.constant 0 : i32
    %c0_i32_1 = arith.constant 0 : i32
    return %arg0, %c0_i32, %c0_i32_0 : i32, i32, i32
  }
}

</mosaic_0001>

<llo_original>
// kernel: tpu_custom_call.1
$region0: #{tpu_custom_call.1}
  #allocation0 [shape = 'u32[]', space=smem, size = 0x4, offset = 0x4, fixed_abs, tag = 'smem constant byte address 0x4 - core index']
  #allocation1 [shape = 'u32[72,128]{1,0:T(1,128)}', space=vmem, size = 0x9000, scoped, tag = 'internal scratch']
  %s0 = inlined_call_operand.hbm [shape: s32[1,1024], index: 0, kind: input, shape index: {}]
  %s1 = inlined_call_operand.hbm [shape: f32[1,1024], index: 1, kind: input, shape index: {}]
  %s2 = inlined_call_operand.hbm [shape: bf16[1024,256], index: 2, kind: input, shape index: {}]
  %s3 = inlined_call_operand.hbm [shape: bf16[256,256], index: 3, kind: input, shape index: {}]
  %s4 = inlined_call_operand.hbm [shape: f32[2,16,256], index: 4, kind: output, shape index: {}]
  %s5 = sld [smem:[#allocation0]]
  $region69: #{tpu_custom_call.1} parent=0
    _
  %s7 = ssub.s32 1, %s5
  %s8 = scalar_select 0, %s7, %s5
  $region1: #{tpu_custom_call.1} parent=0
    #allocation2 [shape = 'u8[2048]{0}', space=vmem, size = 0x800, scoped, tag = 'input window, operand 0']
    #allocation3 [shape = 's32[2]{0}', space=sflag, size = 0x8, scoped, tag = 'scoped memory for tpu_custom_call.1']
    #allocation4 [shape = 's32[2]{0}', space=sflag, size = 0x8, scoped, tag = 'scoped memory for tpu_custom_call.1']
    #allocation5 [shape = 'u8[2048]{0}', space=vmem, size = 0x800, scoped, tag = 'input window, operand 1']
    #allocation6 [shape = 's32[2]{0}', space=sflag, size = 0x8, scoped, tag = 'scoped memory for tpu_custom_call.1']
    #allocation7 [shape = 'u8[262144]{0}', space=vmem, size = 0x40000, scoped, tag = 'input window, operand 2']
    #allocation8 [shape = 'u8[131072]{0}', space=vmem, size = 0x20000, scoped, tag = 'input window, operand 3, single buffered']
    #allocation9 [shape = 's32[1]{0}', space=sflag, size = 0x4, scoped, tag = 'scoped memory for tpu_custom_call.1']
    #allocation10 [shape = 'u8[32768]{0}', space=vmem, size = 0x8000, scoped, tag = 'output window, operand 0']
    %9 = vsyncpa [#allocation3], 0
    %s10 = scalar_lea.sflag [#allocation3], 1
    %11 = vsyncpa %s10, 0
    %12 = vsyncpa [#allocation6], 0
    %s13 = scalar_lea.sflag [#allocation6], 1
    %14 = vsyncpa %s13, 0
    %15 = vsyncpa [#allocation9], 0
    %16 = vsyncpa [#allocation4], 0
    %s17 = scalar_lea.sflag [#allocation4], 1
    %18 = vsyncpa %s17, 0
    loop: start=0, step=1, limit=6
    $region2: #{tpu_custom_call.1} parent=1 // loop_pre_header
      _
    $region3: #{tpu_custom_call.1} parent=1 // loop_header
      %s20 = sphi 0, %s24
      %p21 = scmp.ge.s32.totalorder %s20, 6
      %s27 = sphi 0, %s39
      %s28 = sphi 0, %s35
      %s29 = sphi 0, %s27
      %s30 = sphi 0, %s28
      %s31 = sphi 0, %s29
      %s32 = sphi 0, %s30
      %s46 = sphi 0, %s48
      %s49 = sphi 0, %s46
      %s50 = sphi 0, %s49
      %s66 = sphi 0, %s50
      %s76 = sphi 0, %s78
      %s79 = sphi 0, %s76
      %s80 = sphi 0, %s79
      %s96 = sphi 0, %s80
      %s106 = sphi 0, %s108
      %s109 = sphi 0, %s106
      %s110 = sphi 0, %s109
      %s126 = sphi 0, %s110
      %s130 = sphi 0, %s130
      %s132 = sphi 0, %s130
      %s133 = sphi 0, %s132
      %s147 = sphi 0, %s133
      %s153 = sphi 0, %s155
      %s156 = sphi 0, %s153
      %s157 = sphi 0, %s156
      %s173 = sphi 0, %s157
    $region4: #{tpu_custom_call.1} parent=1 // loop_header_branch
      %23 = sbr.rel (%p21) target = $region8
    $region5: #{tpu_custom_call.1} parent=1 // loop_body
      %s25 = ssub.s32 %s20, 1
      %s26 = ssub.s32 %s20, 2
      %s33 = sadd.s32 1, %s28
      %p34 = scmp.ge.s32.totalorder %s33, 2
      %s35 = scalar_select %p34, 0, %s33
      %s36 = sadd.s32 1, %s27
      %s37 = scalar_select %p34, %s36, %s27
      %p38 = scmp.ge.s32.totalorder %s37, 2
      %s39 = scalar_select %p38, 0, %s37
      %s40 = smul.u32 %s27, 2
      %s41 = sadd.s32 %s40, %s28
      %s42 = smul.u32 %s39, 2
      %s43 = sadd.s32 %s42, %s35
      %s44 = ssub.s32 %s41, %s43
      %p45 = scmp.eq.s32.totalorder %s44, 0
      %s47 = sadd.s32 %s46, 1
      %s48 = scalar_select %p45, %s46, %s47
      %p51 = pneg %p45
      %p52 = scmp.eq.s32.totalorder %s20, 3
      %p53 = por %p51, %p52
      %p54 = scmp.ne.s32.totalorder %s46, %s49
      %p55 = scmp.eq.s32.totalorder %s20, 0
      %p56 = por %p54, %p55
      %p57 = scmp.ne.s32.totalorder %s46, %s49
      %p58 = scmp.eq.s32.totalorder %s25, 3
      %p59 = por %p57, %p58
      %p60 = scmp.ne.s32.totalorder %s49, %s50
      %p61 = scmp.eq.s32.totalorder %s25, 0
      %p62 = por %p60, %p61
      %p63 = scmp.ne.s32.totalorder %s49, %s50
      %p64 = scmp.eq.s32.totalorder %s26, 3
      %p65 = por %p63, %p64
      %p67 = scmp.ne.s32.totalorder %s50, %s66
      %p68 = scmp.eq.s32.totalorder %s26, 0
      %p69 = por %p67, %p68
      %s70 = smul.u32 %s27, 2
      %s71 = sadd.s32 %s70, %s28
      %s72 = smul.u32 %s39, 2
      %s73 = sadd.s32 %s72, %s35
      %s74 = ssub.s32 %s71, %s73
      %p75 = scmp.eq.s32.totalorder %s74, 0
      %s77 = sadd.s32 %s76, 1
      %s78 = scalar_select %p75, %s76, %s77
      %p81 = pneg %p75
      %p82 = scmp.eq.s32.totalorder %s20, 3
      %p83 = por %p81, %p82
      %p84 = scmp.ne.s32.totalorder %s76, %s79
      %p85 = scmp.eq.s32.totalorder %s20, 0
      %p86 = por %p84, %p85
      %p87 = scmp.ne.s32.totalorder %s76, %s79
      %p88 = scmp.eq.s32.totalorder %s25, 3
      %p89 = por %p87, %p88
      %p90 = scmp.ne.s32.totalorder %s79, %s80
      %p91 = scmp.eq.s32.totalorder %s25, 0
      %p92 = por %p90, %p91
      %p93 = scmp.ne.s32.totalorder %s79, %s80
      %p94 = scmp.eq.s32.totalorder %s26, 3
      %p95 = por %p93, %p94
      %p97 = scmp.ne.s32.totalorder %s80, %s96
      %p98 = scmp.eq.s32.totalorder %s26, 0
      %p99 = por %p97, %p98
      %s100 = smul.u32 %s27, 2
      %s101 = sadd.s32 %s100, %s28
      %s102 = smul.u32 %s39, 2
      %s103 = sadd.s32 %s102, %s35
      %s104 = ssub.s32 %s101, %s103
      %p105 = scmp.eq.s32.totalorder %s104, 0
      %s107 = sadd.s32 %s106, 1
      %s108 = scalar_select %p105, %s106, %s107
      %p111 = pneg %p105
      %p112 = scmp.eq.s32.totalorder %s20, 3
      %p113 = por %p111, %p112
      %p114 = scmp.ne.s32.totalorder %s106, %s109
      %p115 = scmp.eq.s32.totalorder %s20, 0
      %p116 = por %p114, %p115
      %p117 = scmp.ne.s32.totalorder %s106, %s109
      %p118 = scmp.eq.s32.totalorder %s25, 3
      %p119 = por %p117, %p118
      %p120 = scmp.ne.s32.totalorder %s109, %s110
      %p121 = scmp.eq.s32.totalorder %s25, 0
      %p122 = por %p120, %p121
      %p123 = scmp.ne.s32.totalorder %s109, %s110
      %p124 = scmp.eq.s32.totalorder %s26, 3
      %p125 = por %p123, %p124
      %p127 = scmp.ne.s32.totalorder %s110, %s126
      %p128 = scmp.eq.s32.totalorder %s26, 0
      %p129 = por %p127, %p128
      %s131 = sadd.s32 %s130, 1
      %p134 = scmp.eq.s32.totalorder %s20, 3
      %p135 = scmp.ne.s32.totalorder %s130, %s132
      %p136 = scmp.eq.s32.totalorder %s20, 0
      %p137 = por %p135, %p136
      %p138 = scmp.ne.s32.totalorder %s130, %s132
      %p139 = scmp.eq.s32.totalorder %s25, 3
      %p140 = por %p138, %p139
      %p141 = scmp.ne.s32.totalorder %s132, %s133
      %p142 = scmp.eq.s32.totalorder %s25, 0
      %p143 = por %p141, %p142
      %p144 = scmp.ne.s32.totalorder %s132, %s133
      %p145 = scmp.eq.s32.totalorder %s26, 3
      %p146 = por %p144, %p145
      %p148 = scmp.ne.s32.totalorder %s133, %s147
      %p149 = scmp.eq.s32.totalorder %s26, 0
      %p150 = por %p148, %p149
      %s151 = ssub.s32 %s27, %s39
      %p152 = scmp.eq.s32.totalorder %s151, 0
      %s154 = sadd.s32 %s153, 1
      %s155 = scalar_select %p152, %s153, %s154
      %p158 = pneg %p152
      %p159 = scmp.eq.s32.totalorder %s20, 3
      %p160 = por %p158, %p159
      %p161 = scmp.ne.s32.totalorder %s153, %s156
      %p162 = scmp.eq.s32.totalorder %s20, 0
      %p163 = por %p161, %p162
      %p164 = scmp.ne.s32.totalorder %s153, %s156
      %p165 = scmp.eq.s32.totalorder %s25, 3
      %p166 = por %p164, %p165
      %p167 = scmp.ne.s32.totalorder %s156, %s157
      %p168 = scmp.eq.s32.totalorder %s25, 0
      %p169 = por %p167, %p168
      %p170 = scmp.ne.s32.totalorder %s156, %s157
      %p171 = scmp.eq.s32.totalorder %s26, 3
      %p172 = por %p170, %p171
      %p174 = scmp.ne.s32.totalorder %s157, %s173
      %p175 = scmp.eq.s32.totalorder %s26, 0
      %p176 = por %p174, %p175
      %p177 = scmp.le.s32.totalorder 1, %s20
      %p178 = scmp.lt.s32.totalorder %s20, 5
      %p179 = pnand %p177, %p178
      %p180 = pneg %p179
      // Predicated region
      $region9: #{tpu_custom_call.1} parent=5 // pred_check
        _
      $region10: #{tpu_custom_call.1} parent=5 // pred_check_branch
        %182 = sbr.rel (%p179) target = $region12
      $region11: #{tpu_custom_call.1} parent=5 // pred_region
        %s183 = ssub.s32 %s20, 1
        // Predicated region
        $region13: #{tpu_custom_call.1} parent=11 // pred_check
          %p184 = pneg %p143
        $region14: #{tpu_custom_call.1} parent=11 // pred_check_branch
          %186 = sbr.rel (%p184) target = $region16
        $region15: #{tpu_custom_call.1} parent=11 // pred_region
          %188 = vsyncadd [#allocation9], 0
          %s189 = sshll.u32 %s3, 4
          %s190 = int_to_ptr.hbm [resolvable:$true] %s189
          %s191 = sshll.u32 [#allocation8], 4
          %s192 = int_to_ptr.vmem [resolvable:$true] %s191
          %197 = dma.hbm_to_vmem [thread:$0]  %s190, 4096, %s192, [#allocation9], 128, 128, 8
        $region16: #{tpu_custom_call.1} parent=11 // pred_fallthru
          _
      $region12: #{tpu_custom_call.1} parent=5 // pred_fallthru
        _
      %p198 = scmp.lt.s32.totalorder %s20, 4
      // Predicated region
      $region17: #{tpu_custom_call.1} parent=5 // pred_check
        %p199 = pneg %p198
      $region18: #{tpu_custom_call.1} parent=5 // pred_check_branch
        %201 = sbr.rel (%p199) target = $region20
      $region19: #{tpu_custom_call.1} parent=5 // pred_region
        // Predicated region
        $region21: #{tpu_custom_call.1} parent=19 // pred_check
          %p202 = pneg %p56
        $region22: #{tpu_custom_call.1} parent=19 // pred_check_branch
          %204 = sbr.rel (%p202) target = $region24
        $region23: #{tpu_custom_call.1} parent=19 // pred_region
          %s205 = sand.u32 %s46, 1
          %s206 = scalar_lea.sflag [#allocation3], %s205
          %s207 = sand.u32 %s46, 1
          %s208 = smul.addr %s207, 2
          %s209 = scalar_lea.vmem [#allocation2], %s208
          %s210 = smul.u32 %s27, 2
          %s211 = sadd.s32 %s210, %s28
          %s212 = smul.u32 2, %s211
          %214 = vsyncadd %s206, 0
          %s215 = scalar_lea.hbm %s0, %s212
          %s217 = sshll.u32 %s215, 4
          %s218 = int_to_ptr.hbm [resolvable:$true] %s217
          %s219 = sshll.u32 %s209, 4
          %s220 = int_to_ptr.vmem [resolvable:$true] %s219
          %222 = dma.hbm_to_vmem [thread:$0]  %s218, 32, %s220, %s206
        $region24: #{tpu_custom_call.1} parent=19 // pred_fallthru
          _
        // Predicated region
        $region25: #{tpu_custom_call.1} parent=19 // pred_check
          %p223 = pneg %p86
        $region26: #{tpu_custom_call.1} parent=19 // pred_check_branch
          %225 = sbr.rel (%p223) target = $region28
        $region27: #{tpu_custom_call.1} parent=19 // pred_region
          %s226 = sand.u32 %s20, 1
          %s227 = scalar_lea.sflag [#allocation6], %s226
          %s228 = sand.u32 %s76, 1
          %s229 = smul.addr %s228, 2
          %s230 = scalar_lea.vmem [#allocation5], %s229
          %s231 = smul.u32 %s27, 2
          %s232 = sadd.s32 %s231, %s28
          %s233 = smul.u32 2, %s232
          %235 = vsyncadd %s227, 0
          %s236 = scalar_lea.hbm %s1, %s233
          %s238 = sshll.u32 %s236, 4
          %s239 = int_to_ptr.hbm [resolvable:$true] %s238
          %s240 = sshll.u32 %s230, 4
          %s241 = int_to_ptr.vmem [resolvable:$true] %s240
          %243 = dma.hbm_to_vmem [thread:$0]  %s239, 32, %s241, %s227
        $region28: #{tpu_custom_call.1} parent=19 // pred_fallthru
          _
        // Predicated region
        $region29: #{tpu_custom_call.1} parent=19 // pred_check
          %p244 = pneg %p116
        $region30: #{tpu_custom_call.1} parent=19 // pred_check_branch
          %246 = sbr.rel (%p244) target = $region32
        $region31: #{tpu_custom_call.1} parent=19 // pred_region
          %s247 = sand.u32 %s20, 1
          %s248 = scalar_lea.sflag [#allocation6], %s247
          %s249 = sand.u32 %s106, 1
          %s250 = smul.addr %s249, 256
          %s251 = scalar_lea.vmem [#allocation7], %s250
          %s252 = smul.u32 %s27, 2
          %s253 = sadd.s32 %s252, %s28
          %s254 = smul.u32 32, %s253
          %256 = vsyncadd %s248, 0
          %s257 = smul.addr %s254, 2
          %s258 = smul.addr %s257, 4
          %s259 = scalar_lea.hbm %s2, %s258
          %s260 = sshll.u32 %s259, 4
          %s261 = int_to_ptr.hbm [resolvable:$true] %s260
          %s262 = sshll.u32 %s251, 4
          %s263 = int_to_ptr.vmem [resolvable:$true] %s262
          %268 = dma.hbm_to_vmem [thread:$0]  %s261, 4096, %s263, %s248, 128, 128, 8
        $region32: #{tpu_custom_call.1} parent=19 // pred_fallthru
          _
      $region20: #{tpu_custom_call.1} parent=5 // pred_fallthru
        _
      %p269 = scmp.le.s32.totalorder 1, %s20
      %p270 = scmp.lt.s32.totalorder %s20, 5
      %p271 = pnand %p269, %p270
      %p272 = pneg %p271
      // Predicated region
      $region33: #{tpu_custom_call.1} parent=5 // pred_check
        _
      $region34: #{tpu_custom_call.1} parent=5 // pred_check_branch
        %274 = sbr.rel (%p271) target = $region36
      $region35: #{tpu_custom_call.1} parent=5 // pred_region
        %s275 = ssub.s32 %s20, 1
        %s276 = sand.u32 %s49, 1
        %s277 = scalar_lea.sflag [#allocation3], %s276
        %s278 = sand.u32 %s49, 1
        %s279 = smul.addr %s278, 2
        %s280 = scalar_lea.vmem [#allocation2], %s279
        // Predicated region
        $region37: #{tpu_custom_call.1} parent=35 // pred_check
          %p281 = pneg %p62
        $region38: #{tpu_custom_call.1} parent=35 // pred_check_branch
          %283 = sbr.rel (%p281) target = $region40
        $region39: #{tpu_custom_call.1} parent=35 // pred_region
          %285 = dma.done %s277, 32
        $region40: #{tpu_custom_call.1} parent=35 // pred_fallthru
          _
        %s286 = sand.u32 %s25, 1
        %s287 = scalar_lea.sflag [#allocation6], %s286
        %s288 = sand.u32 %s79, 1
        %s289 = smul.addr %s288, 2
        %s290 = scalar_lea.vmem [#allocation5], %s289
        // Predicated region
        $region41: #{tpu_custom_call.1} parent=35 // pred_check
          %p291 = pneg %p92
        $region42: #{tpu_custom_call.1} parent=35 // pred_check_branch
          %293 = sbr.rel (%p291) target = $region44
        $region43: #{tpu_custom_call.1} parent=35 // pred_region
          %295 = dma.done %s287, 32
        $region44: #{tpu_custom_call.1} parent=35 // pred_fallthru
          _
        %s296 = sand.u32 %s25, 1
        %s297 = scalar_lea.sflag [#allocation6], %s296
        %s298 = sand.u32 %s109, 1
        %s299 = smul.addr %s298, 256
        %s300 = scalar_lea.vmem [#allocation7], %s299
        // Predicated region
        $region45: #{tpu_custom_call.1} parent=35 // pred_check
          %p301 = pneg %p122
        $region46: #{tpu_custom_call.1} parent=35 // pred_check_branch
          %303 = sbr.rel (%p301) target = $region48
        $region47: #{tpu_custom_call.1} parent=35 // pred_region
          %305 = dma.done %s297, 4096
        $region48: #{tpu_custom_call.1} parent=35 // pred_fallthru
          _
        // Predicated region
        $region49: #{tpu_custom_call.1} parent=35 // pred_check
          %p306 = pneg %p143
        $region50: #{tpu_custom_call.1} parent=35 // pred_check_branch
          %308 = sbr.rel (%p306) target = $region52
        $region51: #{tpu_custom_call.1} parent=35 // pred_region
          %310 = dma.done [#allocation9], 4096
        $region52: #{tpu_custom_call.1} parent=35 // pred_fallthru
          _
        %s311 = sand.u32 %s49, 1
        %s312 = scalar_lea.sflag [#allocation3], %s311
        %s313 = sand.u32 %s49, 1
        %s314 = smul.addr %s313, 2
        %s315 = scalar_lea.vmem [#allocation2], %s314
        %p316 = pneg %p62
        %p317 = pneg %p59
        %s318 = sand.u32 %s25, 1
        %s319 = scalar_lea.sflag [#allocation6], %s318
        %s320 = sand.u32 %s79, 1
        %s321 = smul.addr %s320, 2
        %s322 = scalar_lea.vmem [#allocation5], %s321
        %p323 = pneg %p92
        %p324 = pneg %p89
        %s325 = sand.u32 %s25, 1
        %s326 = scalar_lea.sflag [#allocation6], %s325
        %s327 = sand.u32 %s109, 1
        %s328 = smul.addr %s327, 256
        %s329 = scalar_lea.vmem [#allocation7], %s328
        %p330 = pneg %p122
        %p331 = pneg %p119
        %p332 = pneg %p143
        %p333 = pneg %p140
        %p334 = pneg %p169
        %p335 = pneg %p166
        %s336 = sand.u32 %s156, 1
        %s337 = scalar_lea.sflag [#allocation4], %s336
        %s338 = sand.u32 %s156, 1
        %s339 = smul.addr %s338, 32
        %s340 = scalar_lea.vmem [#allocation10], %s339
        %s341 = smul.u32 %s29, 2
        %s342 = sadd.s32 %s341, %s30
        %s343 = smul.u32 2, %s342
        %s344 = smul.u32 %s29, 2
        %s345 = sadd.s32 %s344, %s30
        %s346 = smul.u32 2, %s345
        %s347 = smul.u32 %s29, 2
        %s348 = sadd.s32 %s347, %s30
        %s349 = smul.u32 32, %s348
        %p350 = scmp.eq.s32.totalorder %s30, 0
        // Predicated region
        $region53: #{tpu_custom_call.1} parent=35 // pred_check
          %p351 = pneg %p350
        $region54: #{tpu_custom_call.1} parent=35 // pred_check_branch
          %353 = sbr.rel (%p351) target = $region56
        $region55: #{tpu_custom_call.1} parent=35 // pred_region
          %354 = vst [vmem:[%s340] sm:$0xff] 0.0
          %355 = vst [vmem:[%s340 + $0x8] sm:$0xff] 0.0
          %356 = vst [vmem:[%s340 + $0x10] sm:$0xff] 0.0
          %357 = vst [vmem:[%s340 + $0x18] sm:$0xff] 0.0
        $region56: #{tpu_custom_call.1} parent=35 // pred_fallthru
          _
        %v358 = vld [vmem:[%s300] sm:$0xff]
        %v359 = vld [vmem:[%s300 + $0x8] sm:$0xff]
        %v360 = vld [vmem:[%s300 + $0x10] sm:$0xff]
        %v361 = vld [vmem:[%s300 + $0x18] sm:$0xff]
        %v362 = vld [vmem:[%s300 + $0x20] sm:$0xff]
        %v363 = vld [vmem:[%s300 + $0x28] sm:$0xff]
        %v364 = vld [vmem:[%s300 + $0x30] sm:$0xff]
        %v365 = vld [vmem:[%s300 + $0x38] sm:$0xff]
        %v366 = vld [vmem:[%s300 + $0x40] sm:$0xff]
        %v367 = vld [vmem:[%s300 + $0x48] sm:$0xff]
        %v368 = vld [vmem:[%s300 + $0x50] sm:$0xff]
        %v369 = vld [vmem:[%s300 + $0x58] sm:$0xff]
        %v370 = vld [vmem:[%s300 + $0x60] sm:$0xff]
        %v371 = vld [vmem:[%s300 + $0x68] sm:$0xff]
        %v372 = vld [vmem:[%s300 + $0x70] sm:$0xff]
        %v373 = vld [vmem:[%s300 + $0x78] sm:$0xff]
        %v374 = vld [vmem:[%s300 + $0x80] sm:$0xff]
        %v375 = vld [vmem:[%s300 + $0x88] sm:$0xff]
        %v376 = vld [vmem:[%s300 + $0x90] sm:$0xff]
        %v377 = vld [vmem:[%s300 + $0x98] sm:$0xff]
        %v378 = vld [vmem:[%s300 + $0xa0] sm:$0xff]
        %v379 = vld [vmem:[%s300 + $0xa8] sm:$0xff]
        %v380 = vld [vmem:[%s300 + $0xb0] sm:$0xff]
        %v381 = vld [vmem:[%s300 + $0xb8] sm:$0xff]
        %v382 = vld [vmem:[%s300 + $0xc0] sm:$0xff]
        %v383 = vld [vmem:[%s300 + $0xc8] sm:$0xff]
        %v384 = vld [vmem:[%s300 + $0xd0] sm:$0xff]
        %v385 = vld [vmem:[%s300 + $0xd8] sm:$0xff]
        %v386 = vld [vmem:[%s300 + $0xe0] sm:$0xff]
        %v387 = vld [vmem:[%s300 + $0xe8] sm:$0xff]
        %v388 = vld [vmem:[%s300 + $0xf0] sm:$0xff]
        %v389 = vld [vmem:[%s300 + $0xf8] sm:$0xff]
        %v390 = vld [vmem:[#allocation8] sm:$0xff]
        %v391 = vld [vmem:[#allocation8 + $0x8] sm:$0xff]
        %v392 = vld [vmem:[#allocation8 + $0x10] sm:$0xff]
        %v393 = vld [vmem:[#allocation8 + $0x18] sm:$0xff]
        %v394 = vld [vmem:[#allocation8 + $0x20] sm:$0xff]
        %v395 = vld [vmem:[#allocation8 + $0x28] sm:$0xff]
        %v396 = vld [vmem:[#allocation8 + $0x30] sm:$0xff]
        %v397 = vld [vmem:[#allocation8 + $0x38] sm:$0xff]
        %v398 = vld [vmem:[#allocation8 + $0x40] sm:$0xff]
        %v399 = vld [vmem:[#allocation8 + $0x48] sm:$0xff]
        %v400 = vld [vmem:[#allocation8 + $0x50] sm:$0xff]
        %v401 = vld [vmem:[#allocation8 + $0x58] sm:$0xff]
        %v402 = vld [vmem:[#allocation8 + $0x60] sm:$0xff]
        %v403 = vld [vmem:[#allocation8 + $0x68] sm:$0xff]
        %v404 = vld [vmem:[#allocation8 + $0x70] sm:$0xff]
        %v405 = vld [vmem:[#allocation8 + $0x78] sm:$0xff]
        %v406 = vld [vmem:[#allocation8 + $0x80] sm:$0xff]
        %v407 = vld [vmem:[#allocation8 + $0x88] sm:$0xff]
        %v408 = vld [vmem:[#allocation8 + $0x90] sm:$0xff]
        %v409 = vld [vmem:[#allocation8 + $0x98] sm:$0xff]
        %v410 = vld [vmem:[#allocation8 + $0xa0] sm:$0xff]
        %v411 = vld [vmem:[#allocation8 + $0xa8] sm:$0xff]
        %v412 = vld [vmem:[#allocation8 + $0xb0] sm:$0xff]
        %v413 = vld [vmem:[#allocation8 + $0xb8] sm:$0xff]
        %v414 = vld [vmem:[#allocation8 + $0xc0] sm:$0xff]
        %v415 = vld [vmem:[#allocation8 + $0xc8] sm:$0xff]
        %v416 = vld [vmem:[#allocation8 + $0xd0] sm:$0xff]
        %v417 = vld [vmem:[#allocation8 + $0xd8] sm:$0xff]
        %v418 = vld [vmem:[#allocation8 + $0xe0] sm:$0xff]
        %v419 = vld [vmem:[#allocation8 + $0xe8] sm:$0xff]
        %v420 = vld [vmem:[#allocation8 + $0xf0] sm:$0xff]
        %v421 = vld [vmem:[#allocation8 + $0xf8] sm:$0xff]
        %v454 = vunpack.c.l.b16 %v358
        %v455 = vunpack.c.h.b16 %v358
        %v456 = vunpack.c.l.b16 %v359
        %v457 = vunpack.c.h.b16 %v359
        %v458 = vunpack.c.l.b16 %v360
        %v459 = vunpack.c.h.b16 %v360
        %v460 = vunpack.c.l.b16 %v361
        %v461 = vunpack.c.h.b16 %v361
        %v462 = vunpack.c.l.b16 %v362
        %v463 = vunpack.c.h.b16 %v362
        %v464 = vunpack.c.l.b16 %v363
        %v465 = vunpack.c.h.b16 %v363
        %v466 = vunpack.c.l.b16 %v364
        %v467 = vunpack.c.h.b16 %v364
        %v468 = vunpack.c.l.b16 %v365
        %v469 = vunpack.c.h.b16 %v365
        %v470 = vunpack.c.l.b16 %v366
        %v471 = vunpack.c.h.b16 %v366
        %v472 = vunpack.c.l.b16 %v367
        %v473 = vunpack.c.h.b16 %v367
        %v474 = vunpack.c.l.b16 %v368
        %v475 = vunpack.c.h.b16 %v368
        %v476 = vunpack.c.l.b16 %v369
        %v477 = vunpack.c.h.b16 %v369
        %v478 = vunpack.c.l.b16 %v370
        %v479 = vunpack.c.h.b16 %v370
        %v480 = vunpack.c.l.b16 %v371
        %v481 = vunpack.c.h.b16 %v371
        %v482 = vunpack.c.l.b16 %v372
        %v483 = vunpack.c.h.b16 %v372
        %v484 = vunpack.c.l.b16 %v373
        %v485 = vunpack.c.h.b16 %v373
        %v486 = vunpack.c.l.b16 %v374
        %v487 = vunpack.c.h.b16 %v374
        %v488 = vunpack.c.l.b16 %v375
        %v489 = vunpack.c.h.b16 %v375
        %v490 = vunpack.c.l.b16 %v376
        %v491 = vunpack.c.h.b16 %v376
        %v492 = vunpack.c.l.b16 %v377
        %v493 = vunpack.c.h.b16 %v377
        %v494 = vunpack.c.l.b16 %v378
        %v495 = vunpack.c.h.b16 %v378
        %v496 = vunpack.c.l.b16 %v379
        %v497 = vunpack.c.h.b16 %v379
        %v498 = vunpack.c.l.b16 %v380
        %v499 = vunpack.c.h.b16 %v380
        %v500 = vunpack.c.l.b16 %v381
        %v501 = vunpack.c.h.b16 %v381
        %v502 = vunpack.c.l.b16 %v382
        %v503 = vunpack.c.h.b16 %v382
        %v504 = vunpack.c.l.b16 %v383
        %v505 = vunpack.c.h.b16 %v383
        %v506 = vunpack.c.l.b16 %v384
        %v507 = vunpack.c.h.b16 %v384
        %v508 = vunpack.c.l.b16 %v385
        %v509 = vunpack.c.h.b16 %v385
        %v510 = vunpack.c.l.b16 %v386
        %v511 = vunpack.c.h.b16 %v386
        %v512 = vunpack.c.l.b16 %v387
        %v513 = vunpack.c.h.b16 %v387
        %v514 = vunpack.c.l.b16 %v388
        %v515 = vunpack.c.h.b16 %v388
        %v516 = vunpack.c.l.b16 %v389
        %v517 = vunpack.c.h.b16 %v389
        %v518 = vpack.c.b16 %v456, %v454
        %v519 = vpack.c.b16 %v457, %v455
        %v520 = vpack.c.b16 %v460, %v458
        %v521 = vpack.c.b16 %v461, %v459
        %v522 = vpack.c.b16 %v464, %v462
        %v523 = vpack.c.b16 %v465, %v463
        %v524 = vpack.c.b16 %v468, %v466
        %v525 = vpack.c.b16 %v469, %v467
        %v526 = vpack.c.b16 %v472, %v470
        %v527 = vpack.c.b16 %v473, %v471
        %v528 = vpack.c.b16 %v476, %v474
        %v529 = vpack.c.b16 %v477, %v475
        %v530 = vpack.c.b16 %v480, %v478
        %v531 = vpack.c.b16 %v481, %v479
        %v532 = vpack.c.b16 %v484, %v482
        %v533 = vpack.c.b16 %v485, %v483
        %v534 = vpack.c.b16 %v488, %v486
        %v535 = vpack.c.b16 %v489, %v487
        %v536 = vpack.c.b16 %v492, %v490
        %v537 = vpack.c.b16 %v493, %v491
        %v538 = vpack.c.b16 %v496, %v494
        %v539 = vpack.c.b16 %v497, %v495
        %v540 = vpack.c.b16 %v500, %v498
        %v541 = vpack.c.b16 %v501, %v499
        %v542 = vpack.c.b16 %v504, %v502
        %v543 = vpack.c.b16 %v505, %v503
        %v544 = vpack.c.b16 %v508, %v506
        %v545 = vpack.c.b16 %v509, %v507
        %v546 = vpack.c.b16 %v512, %v510
        %v547 = vpack.c.b16 %v513, %v511
        %v548 = vpack.c.b16 %v516, %v514
        %v549 = vpack.c.b16 %v517, %v515
        %v614 = vunpack.c.l.b16 %v390
        %v615 = vunpack.c.h.b16 %v390
        %v616 = vunpack.c.l.b16 %v391
        %v617 = vunpack.c.h.b16 %v391
        %v618 = vunpack.c.l.b16 %v392
        %v619 = vunpack.c.h.b16 %v392
        %v620 = vunpack.c.l.b16 %v393
        %v621 = vunpack.c.h.b16 %v393
        %v622 = vunpack.c.l.b16 %v394
        %v623 = vunpack.c.h.b16 %v394
        %v624 = vunpack.c.l.b16 %v395
        %v625 = vunpack.c.h.b16 %v395
        %v626 = vunpack.c.l.b16 %v396
        %v627 = vunpack.c.h.b16 %v396
        %v628 = vunpack.c.l.b16 %v397
        %v629 = vunpack.c.h.b16 %v397
        %v630 = vunpack.c.l.b16 %v398
        %v631 = vunpack.c.h.b16 %v398
        %v632 = vunpack.c.l.b16 %v399
        %v633 = vunpack.c.h.b16 %v399
        %v634 = vunpack.c.l.b16 %v400
        %v635 = vunpack.c.h.b16 %v400
        %v636 = vunpack.c.l.b16 %v401
        %v637 = vunpack.c.h.b16 %v401
        %v638 = vunpack.c.l.b16 %v402
        %v639 = vunpack.c.h.b16 %v402
        %v640 = vunpack.c.l.b16 %v403
        %v641 = vunpack.c.h.b16 %v403
        %v642 = vunpack.c.l.b16 %v404
        %v643 = vunpack.c.h.b16 %v404
        %v644 = vunpack.c.l.b16 %v405
        %v645 = vunpack.c.h.b16 %v405
        %v646 = vunpack.c.l.b16 %v406
        %v647 = vunpack.c.h.b16 %v406
        %v648 = vunpack.c.l.b16 %v407
        %v649 = vunpack.c.h.b16 %v407
        %v650 = vunpack.c.l.b16 %v408
        %v651 = vunpack.c.h.b16 %v408
        %v652 = vunpack.c.l.b16 %v409
        %v653 = vunpack.c.h.b16 %v409
        %v654 = vunpack.c.l.b16 %v410
        %v655 = vunpack.c.h.b16 %v410
        %v656 = vunpack.c.l.b16 %v411
        %v657 = vunpack.c.h.b16 %v411
        %v658 = vunpack.c.l.b16 %v412
        %v659 = vunpack.c.h.b16 %v412
        %v660 = vunpack.c.l.b16 %v413
        %v661 = vunpack.c.h.b16 %v413
        %v662 = vunpack.c.l.b16 %v414
        %v663 = vunpack.c.h.b16 %v414
        %v664 = vunpack.c.l.b16 %v415
        %v665 = vunpack.c.h.b16 %v415
        %v666 = vunpack.c.l.b16 %v416
        %v667 = vunpack.c.h.b16 %v416
        %v668 = vunpack.c.l.b16 %v417
        %v669 = vunpack.c.h.b16 %v417
        %v670 = vunpack.c.l.b16 %v418
        %v671 = vunpack.c.h.b16 %v418
        %v672 = vunpack.c.l.b16 %v419
        %v673 = vunpack.c.h.b16 %v419
        %v674 = vunpack.c.l.b16 %v420
        %v675 = vunpack.c.h.b16 %v420
        %v676 = vunpack.c.l.b16 %v421
        %v677 = vunpack.c.h.b16 %v421
        %v678 = vpack.c.b16 %v616, %v614
        %v679 = vpack.c.b16 %v617, %v615
        %v680 = vpack.c.b16 %v620, %v618
        %v681 = vpack.c.b16 %v621, %v619
        %v682 = vpack.c.b16 %v624, %v622
        %v683 = vpack.c.b16 %v625, %v623
        %v684 = vpack.c.b16 %v628, %v626
        %v685 = vpack.c.b16 %v629, %v627
        %v686 = vpack.c.b16 %v632, %v630
        %v687 = vpack.c.b16 %v633, %v631
        %v688 = vpack.c.b16 %v636, %v634
        %v689 = vpack.c.b16 %v637, %v635
        %v690 = vpack.c.b16 %v640, %v638
        %v691 = vpack.c.b16 %v641, %v639
        %v692 = vpack.c.b16 %v644, %v642
        %v693 = vpack.c.b16 %v645, %v643
        %v694 = vpack.c.b16 %v648, %v646
        %v695 = vpack.c.b16 %v649, %v647
        %v696 = vpack.c.b16 %v652, %v650
        %v697 = vpack.c.b16 %v653, %v651
        %v698 = vpack.c.b16 %v656, %v654
        %v699 = vpack.c.b16 %v657, %v655
        %v700 = vpack.c.b16 %v660, %v658
        %v701 = vpack.c.b16 %v661, %v659
        %v702 = vpack.c.b16 %v664, %v662
        %v703 = vpack.c.b16 %v665, %v663
        %v704 = vpack.c.b16 %v668, %v666
        %v705 = vpack.c.b16 %v669, %v667
        %v706 = vpack.c.b16 %v672, %v670
        %v707 = vpack.c.b16 %v673, %v671
        %v708 = vpack.c.b16 %v676, %v674
        %v709 = vpack.c.b16 %v677, %v675
        %742 = vmatpush.bf16.msra.mxu0 %v692
        %743 = vmatpush.bf16.msra.mxu0 %v690
        %744 = vmatpush.bf16.msra.mxu0 %v688
        %745 = vmatpush.bf16.msra.mxu0 %v686
        %746 = vmatpush.bf16.msra.mxu0 %v684
        %747 = vmatpush.bf16.msra.mxu0 %v682
        %748 = vmatpush.bf16.msra.mxu0 %v680
        %749 = vmatpush.bf16.msra.mxu0 %v678
        %750 = vmatmul.bf16.gmra.mxu0 %v518
        %v751 = vpop.f32.mrf.mxu0
        %v752 = vadd.f32 0.0, %v751
        %v753 = vpop.f32.mrf.mxu0
        %v754 = vadd.f32 0.0, %v753
        %755 = vmatmul.bf16.gmra.mxu0 %v520
        %v756 = vpop.f32.mrf.mxu0
        %v757 = vadd.f32 0.0, %v756
        %v758 = vpop.f32.mrf.mxu0
        %v759 = vadd.f32 0.0, %v758
        %760 = vmatmul.bf16.gmra.mxu0 %v522
        %v761 = vpop.f32.mrf.mxu0
        %v762 = vadd.f32 0.0, %v761
        %v763 = vpop.f32.mrf.mxu0
        %v764 = vadd.f32 0.0, %v763
        %765 = vmatmul.bf16.gmra.mxu0 %v524
        %v766 = vpop.f32.mrf.mxu0
        %v767 = vadd.f32 0.0, %v766
        %v768 = vpop.f32.mrf.mxu0
        %v769 = vadd.f32 0.0, %v768
        %770 = vmatmul.bf16.gmra.mxu0 %v526
        %v771 = vpop.f32.mrf.mxu0
        %v772 = vadd.f32 0.0, %v771
        %v773 = vpop.f32.mrf.mxu0
        %v774 = vadd.f32 0.0, %v773
        %775 = vmatmul.bf16.gmra.mxu0 %v528
        %v776 = vpop.f32.mrf.mxu0
        %v777 = vadd.f32 0.0, %v776
        %v778 = vpop.f32.mrf.mxu0
        %v779 = vadd.f32 0.0, %v778
        %780 = vmatmul.bf16.gmra.mxu0 %v530
        %v781 = vpop.f32.mrf.mxu0
        %v782 = vadd.f32 0.0, %v781
        %v783 = vpop.f32.mrf.mxu0
        %v784 = vadd.f32 0.0, %v783
        %785 = vmatmul.bf16.gmra.mxu0 %v532
        %v786 = vpop.f32.mrf.mxu0
        %v787 = vadd.f32 0.0, %v786
        %v788 = vpop.f32.mrf.mxu0
        %v789 = vadd.f32 0.0, %v788
        %790 = vmatmul.bf16.gmra.mxu0 %v534
        %v791 = vpop.f32.mrf.mxu0
        %v792 = vadd.f32 0.0, %v791
        %v793 = vpop.f32.mrf.mxu0
        %v794 = vadd.f32 0.0, %v793
        %795 = vmatmul.bf16.gmra.mxu0 %v536
        %v796 = vpop.f32.mrf.mxu0
        %v797 = vadd.f32 0.0, %v796
        %v798 = vpop.f32.mrf.mxu0
        %v799 = vadd.f32 0.0, %v798
        %800 = vmatmul.bf16.gmra.mxu0 %v538
        %v801 = vpop.f32.mrf.mxu0
        %v802 = vadd.f32 0.0, %v801
        %v803 = vpop.f32.mrf.mxu0
        %v804 = vadd.f32 0.0, %v803
        %805 = vmatmul.bf16.gmra.mxu0 %v540
        %v806 = vpop.f32.mrf.mxu0
        %v807 = vadd.f32 0.0, %v806
        %v808 = vpop.f32.mrf.mxu0
        %v809 = vadd.f32 0.0, %v808
        %810 = vmatmul.bf16.gmra.mxu0 %v542
        %v811 = vpop.f32.mrf.mxu0
        %v812 = vadd.f32 0.0, %v811
        %v813 = vpop.f32.mrf.mxu0
        %v814 = vadd.f32 0.0, %v813
        %815 = vmatmul.bf16.gmra.mxu0 %v544
        %v816 = vpop.f32.mrf.mxu0
        %v817 = vadd.f32 0.0, %v816
        %v818 = vpop.f32.mrf.mxu0
        %v819 = vadd.f32 0.0, %v818
        %820 = vmatmul.bf16.gmra.mxu0 %v546
        %v821 = vpop.f32.mrf.mxu0
        %v822 = vadd.f32 0.0, %v821
        %v823 = vpop.f32.mrf.mxu0
        %v824 = vadd.f32 0.0, %v823
        %825 = vmatmul.bf16.gmra.mxu0 %v548
        %v826 = vpop.f32.mrf.mxu0
        %v827 = vadd.f32 0.0, %v826
        %v828 = vpop.f32.mrf.mxu0
        %v829 = vadd.f32 0.0, %v828
        %830 = vdwg.mxu0
        %831 = vmatpush.bf16.msra.mxu0 %v708
        %832 = vmatpush.bf16.msra.mxu0 %v706
        %833 = vmatpush.bf16.msra.mxu0 %v704
        %834 = vmatpush.bf16.msra.mxu0 %v702
        %835 = vmatpush.bf16.msra.mxu0 %v700
        %836 = vmatpush.bf16.msra.mxu0 %v698
        %837 = vmatpush.bf16.msra.mxu0 %v696
        %838 = vmatpush.bf16.msra.mxu0 %v694
        %839 = vmatmul.bf16.gmra.mxu0 %v519
        %v840 = vpop.f32.mrf.mxu0
        %v841 = vadd.f32 %v752, %v840
        %v842 = vpop.f32.mrf.mxu0
        %v843 = vadd.f32 %v754, %v842
        %844 = vmatmul.bf16.gmra.mxu0 %v521
        %v845 = vpop.f32.mrf.mxu0
        %v846 = vadd.f32 %v757, %v845
        %v847 = vpop.f32.mrf.mxu0
        %v848 = vadd.f32 %v759, %v847
        %849 = vmatmul.bf16.gmra.mxu0 %v523
        %v850 = vpop.f32.mrf.mxu0
        %v851 = vadd.f32 %v762, %v850
        %v852 = vpop.f32.mrf.mxu0
        %v853 = vadd.f32 %v764, %v852
        %854 = vmatmul.bf16.gmra.mxu0 %v525
        %v855 = vpop.f32.mrf.mxu0
        %v856 = vadd.f32 %v767, %v855
        %v857 = vpop.f32.mrf.mxu0
        %v858 = vadd.f32 %v769, %v857
        %859 = vmatmul.bf16.gmra.mxu0 %v527
        %v860 = vpop.f32.mrf.mxu0
        %v861 = vadd.f32 %v772, %v860
        %v862 = vpop.f32.mrf.mxu0
        %v863 = vadd.f32 %v774, %v862
        %864 = vmatmul.bf16.gmra.mxu0 %v529
        %v865 = vpop.f32.mrf.mxu0
        %v866 = vadd.f32 %v777, %v865
        %v867 = vpop.f32.mrf.mxu0
        %v868 = vadd.f32 %v779, %v867
        %869 = vmatmul.bf16.gmra.mxu0 %v531
        %v870 = vpop.f32.mrf.mxu0
        %v871 = vadd.f32 %v782, %v870
        %v872 = vpop.f32.mrf.mxu0
        %v873 = vadd.f32 %v784, %v872
        %874 = vmatmul.bf16.gmra.mxu0 %v533
        %v875 = vpop.f32.mrf.mxu0
        %v876 = vadd.f32 %v787, %v875
        %v877 = vpop.f32.mrf.mxu0
        %v878 = vadd.f32 %v789, %v877
        %879 = vmatmul.bf16.gmra.mxu0 %v535
        %v880 = vpop.f32.mrf.mxu0
        %v881 = vadd.f32 %v792, %v880
        %v882 = vpop.f32.mrf.mxu0
        %v883 = vadd.f32 %v794, %v882
        %884 = vmatmul.bf16.gmra.mxu0 %v537
        %v885 = vpop.f32.mrf.mxu0
        %v886 = vadd.f32 %v797, %v885
        %v887 = vpop.f32.mrf.mxu0
        %v888 = vadd.f32 %v799, %v887
        %889 = vmatmul.bf16.gmra.mxu0 %v539
        %v890 = vpop.f32.mrf.mxu0
        %v891 = vadd.f32 %v802, %v890
        %v892 = vpop.f32.mrf.mxu0
        %v893 = vadd.f32 %v804, %v892
        %894 = vmatmul.bf16.gmra.mxu0 %v541
        %v895 = vpop.f32.mrf.mxu0
        %v896 = vadd.f32 %v807, %v895
        %v897 = vpop.f32.mrf.mxu0
        %v898 = vadd.f32 %v809, %v897
        %899 = vmatmul.bf16.gmra.mxu0 %v543
        %v900 = vpop.f32.mrf.mxu0
        %v901 = vadd.f32 %v812, %v900
        %v902 = vpop.f32.mrf.mxu0
        %v903 = vadd.f32 %v814, %v902
        %904 = vmatmul.bf16.gmra.mxu0 %v545
        %v905 = vpop.f32.mrf.mxu0
        %v906 = vadd.f32 %v817, %v905
        %v907 = vpop.f32.mrf.mxu0
        %v908 = vadd.f32 %v819, %v907
        %909 = vmatmul.bf16.gmra.mxu0 %v547
        %v910 = vpop.f32.mrf.mxu0
        %v911 = vadd.f32 %v822, %v910
        %v912 = vpop.f32.mrf.mxu0
        %v913 = vadd.f32 %v824, %v912
        %914 = vmatmul.bf16.gmra.mxu0 %v549
        %v915 = vpop.f32.mrf.mxu0
        %v916 = vadd.f32 %v827, %v915
        %v917 = vpop.f32.mrf.mxu0
        %v918 = vadd.f32 %v829, %v917
        %919 = vdwg.mxu0
        %920 = vmatpush.bf16.msra.mxu0 %v693
        %921 = vmatpush.bf16.msra.mxu0 %v691
        %922 = vmatpush.bf16.msra.mxu0 %v689
        %923 = vmatpush.bf16.msra.mxu0 %v687
        %924 = vmatpush.bf16.msra.mxu0 %v685
        %925 = vmatpush.bf16.msra.mxu0 %v683
        %926 = vmatpush.bf16.msra.mxu0 %v681
        %927 = vmatpush.bf16.msra.mxu0 %v679
        %928 = vmatmul.bf16.gmra.mxu0 %v518
        %v929 = vpop.f32.mrf.mxu0
        %v930 = vadd.f32 0.0, %v929
        %v931 = vpop.f32.mrf.mxu0
        %v932 = vadd.f32 0.0, %v931
        %933 = vmatmul.bf16.gmra.mxu0 %v520
        %v934 = vpop.f32.mrf.mxu0
        %v935 = vadd.f32 0.0, %v934
        %v936 = vpop.f32.mrf.mxu0
        %v937 = vadd.f32 0.0, %v936
        %938 = vmatmul.bf16.gmra.mxu0 %v522
        %v939 = vpop.f32.mrf.mxu0
        %v940 = vadd.f32 0.0, %v939
        %v941 = vpop.f32.mrf.mxu0
        %v942 = vadd.f32 0.0, %v941
        %943 = vmatmul.bf16.gmra.mxu0 %v524
        %v944 = vpop.f32.mrf.mxu0
        %v945 = vadd.f32 0.0, %v944
        %v946 = vpop.f32.mrf.mxu0
        %v947 = vadd.f32 0.0, %v946
        %948 = vmatmul.bf16.gmra.mxu0 %v526
        %v949 = vpop.f32.mrf.mxu0
        %v950 = vadd.f32 0.0, %v949
        %v951 = vpop.f32.mrf.mxu0
        %v952 = vadd.f32 0.0, %v951
        %953 = vmatmul.bf16.gmra.mxu0 %v528
        %v954 = vpop.f32.mrf.mxu0
        %v955 = vadd.f32 0.0, %v954
        %v956 = vpop.f32.mrf.mxu0
        %v957 = vadd.f32 0.0, %v956
        %958 = vmatmul.bf16.gmra.mxu0 %v530
        %v959 = vpop.f32.mrf.mxu0
        %v960 = vadd.f32 0.0, %v959
        %v961 = vpop.f32.mrf.mxu0
        %v962 = vadd.f32 0.0, %v961
        %963 = vmatmul.bf16.gmra.mxu0 %v532
        %v964 = vpop.f32.mrf.mxu0
        %v965 = vadd.f32 0.0, %v964
        %v966 = vpop.f32.mrf.mxu0
        %v967 = vadd.f32 0.0, %v966
        %968 = vmatmul.bf16.gmra.mxu0 %v534
        %v969 = vpop.f32.mrf.mxu0
        %v970 = vadd.f32 0.0, %v969
        %v971 = vpop.f32.mrf.mxu0
        %v972 = vadd.f32 0.0, %v971
        %973 = vmatmul.bf16.gmra.mxu0 %v536
        %v974 = vpop.f32.mrf.mxu0
        %v975 = vadd.f32 0.0, %v974
        %v976 = vpop.f32.mrf.mxu0
        %v977 = vadd.f32 0.0, %v976
        %978 = vmatmul.bf16.gmra.mxu0 %v538
        %v979 = vpop.f32.mrf.mxu0
        %v980 = vadd.f32 0.0, %v979
        %v981 = vpop.f32.mrf.mxu0
        %v982 = vadd.f32 0.0, %v981
        %983 = vmatmul.bf16.gmra.mxu0 %v540
        %v984 = vpop.f32.mrf.mxu0
        %v985 = vadd.f32 0.0, %v984
        %v986 = vpop.f32.mrf.mxu0
        %v987 = vadd.f32 0.0, %v986
        %988 = vmatmul.bf16.gmra.mxu0 %v542
        %v989 = vpop.f32.mrf.mxu0
        %v990 = vadd.f32 0.0, %v989
        %v991 = vpop.f32.mrf.mxu0
        %v992 = vadd.f32 0.0, %v991
        %993 = vmatmul.bf16.gmra.mxu0 %v544
        %v994 = vpop.f32.mrf.mxu0
        %v995 = vadd.f32 0.0, %v994
        %v996 = vpop.f32.mrf.mxu0
        %v997 = vadd.f32 0.0, %v996
        %998 = vmatmul.bf16.gmra.mxu0 %v546
        %v999 = vpop.f32.mrf.mxu0
        %v1000 = vadd.f32 0.0, %v999
        %v1001 = vpop.f32.mrf.mxu0
        %v1002 = vadd.f32 0.0, %v1001
        %1003 = vmatmul.bf16.gmra.mxu0 %v548
        %v1004 = vpop.f32.mrf.mxu0
        %v1005 = vadd.f32 0.0, %v1004
        %v1006 = vpop.f32.mrf.mxu0
        %v1007 = vadd.f32 0.0, %v1006
        %1008 = vdwg.mxu0
        %1009 = vmatpush.bf16.msra.mxu0 %v709
        %1010 = vmatpush.bf16.msra.mxu0 %v707
        %1011 = vmatpush.bf16.msra.mxu0 %v705
        %1012 = vmatpush.bf16.msra.mxu0 %v703
        %1013 = vmatpush.bf16.msra.mxu0 %v701
        %1014 = vmatpush.bf16.msra.mxu0 %v699
        %1015 = vmatpush.bf16.msra.mxu0 %v697
        %1016 = vmatpush.bf16.msra.mxu0 %v695
        %1017 = vmatmul.bf16.gmra.mxu0 %v519
        %v1018 = vpop.f32.mrf.mxu0
        %v1019 = vadd.f32 %v930, %v1018
        %v1020 = vpop.f32.mrf.mxu0
        %v1021 = vadd.f32 %v932, %v1020
        %1022 = vmatmul.bf16.gmra.mxu0 %v521
        %v1023 = vpop.f32.mrf.mxu0
        %v1024 = vadd.f32 %v935, %v1023
        %v1025 = vpop.f32.mrf.mxu0
        %v1026 = vadd.f32 %v937, %v1025
        %1027 = vmatmul.bf16.gmra.mxu0 %v523
        %v1028 = vpop.f32.mrf.mxu0
        %v1029 = vadd.f32 %v940, %v1028
        %v1030 = vpop.f32.mrf.mxu0
        %v1031 = vadd.f32 %v942, %v1030
        %1032 = vmatmul.bf16.gmra.mxu0 %v525
        %v1033 = vpop.f32.mrf.mxu0
        %v1034 = vadd.f32 %v945, %v1033
        %v1035 = vpop.f32.mrf.mxu0
        %v1036 = vadd.f32 %v947, %v1035
        %1037 = vmatmul.bf16.gmra.mxu0 %v527
        %v1038 = vpop.f32.mrf.mxu0
        %v1039 = vadd.f32 %v950, %v1038
        %v1040 = vpop.f32.mrf.mxu0
        %v1041 = vadd.f32 %v952, %v1040
        %1042 = vmatmul.bf16.gmra.mxu0 %v529
        %v1043 = vpop.f32.mrf.mxu0
        %v1044 = vadd.f32 %v955, %v1043
        %v1045 = vpop.f32.mrf.mxu0
        %v1046 = vadd.f32 %v957, %v1045
        %1047 = vmatmul.bf16.gmra.mxu0 %v531
        %v1048 = vpop.f32.mrf.mxu0
        %v1049 = vadd.f32 %v960, %v1048
        %v1050 = vpop.f32.mrf.mxu0
        %v1051 = vadd.f32 %v962, %v1050
        %1052 = vmatmul.bf16.gmra.mxu0 %v533
        %v1053 = vpop.f32.mrf.mxu0
        %v1054 = vadd.f32 %v965, %v1053
        %v1055 = vpop.f32.mrf.mxu0
        %v1056 = vadd.f32 %v967, %v1055
        %1057 = vmatmul.bf16.gmra.mxu0 %v535
        %v1058 = vpop.f32.mrf.mxu0
        %v1059 = vadd.f32 %v970, %v1058
        %v1060 = vpop.f32.mrf.mxu0
        %v1061 = vadd.f32 %v972, %v1060
        %1062 = vmatmul.bf16.gmra.mxu0 %v537
        %v1063 = vpop.f32.mrf.mxu0
        %v1064 = vadd.f32 %v975, %v1063
        %v1065 = vpop.f32.mrf.mxu0
        %v1066 = vadd.f32 %v977, %v1065
        %1067 = vmatmul.bf16.gmra.mxu0 %v539
        %v1068 = vpop.f32.mrf.mxu0
        %v1069 = vadd.f32 %v980, %v1068
        %v1070 = vpop.f32.mrf.mxu0
        %v1071 = vadd.f32 %v982, %v1070
        %1072 = vmatmul.bf16.gmra.mxu0 %v541
        %v1073 = vpop.f32.mrf.mxu0
        %v1074 = vadd.f32 %v985, %v1073
        %v1075 = vpop.f32.mrf.mxu0
        %v1076 = vadd.f32 %v987, %v1075
        %1077 = vmatmul.bf16.gmra.mxu0 %v543
        %v1078 = vpop.f32.mrf.mxu0
        %v1079 = vadd.f32 %v990, %v1078
        %v1080 = vpop.f32.mrf.mxu0
        %v1081 = vadd.f32 %v992, %v1080
        %1082 = vmatmul.bf16.gmra.mxu0 %v545
        %v1083 = vpop.f32.mrf.mxu0
        %v1084 = vadd.f32 %v995, %v1083
        %v1085 = vpop.f32.mrf.mxu0
        %v1086 = vadd.f32 %v997, %v1085
        %1087 = vmatmul.bf16.gmra.mxu0 %v547
        %v1088 = vpop.f32.mrf.mxu0
        %v1089 = vadd.f32 %v1000, %v1088
        %v1090 = vpop.f32.mrf.mxu0
        %v1091 = vadd.f32 %v1002, %v1090
        %1092 = vmatmul.bf16.gmra.mxu0 %v549
        %v1093 = vpop.f32.mrf.mxu0
        %v1094 = vadd.f32 %v1005, %v1093
        %v1095 = vpop.f32.mrf.mxu0
        %v1096 = vadd.f32 %v1007, %v1095
        %1097 = vdwg.mxu0
        %v1098 = vlaneseq
        %v1099 = vshrl.u32 %v1098, 7
        %v1100 = vadd.s32 %v1099, 8
        %v1101 = vld [vmem:[%s280] sm:$0x3]
        %v1102 = vperm.slane %v1101, 0
        %v1103 = vperm.slane %v1101, 1
        %vm1104 = vcmp.eq.s32.totalorder %v1099, %v1102
        %vm1105 = vcmp.eq.s32.totalorder %v1099, %v1103
        %vm1106 = vcmp.eq.s32.totalorder %v1100, %v1102
        %vm1107 = vcmp.eq.s32.totalorder %v1100, %v1103
        %v1108 = vld [vmem:[%s290] sm:$0x3]
        %v1110 = vperm.slane %v1108, 0
        %v1111 = vperm.slane %v1108, 1
        %v1114 = vsel %vm1104, %v1110, 0.0
        %v1115 = vsel %vm1105, %v1111, 0.0
        %v1116 = vsel %vm1106, %v1110, 0.0
        %v1117 = vsel %vm1107, %v1111, 0.0
        %v1118 = vpack.c.bf16 %v1116, %v1114
        %v1119 = vpack.c.bf16 %v1117, %v1115
        %v1120 = vld [vmem:[%s340] sm:$0xff]
        %v1121 = vld [vmem:[%s340 + $0x8] sm:$0xff]
        %v1122 = vld [vmem:[%s340 + $0x10] sm:$0xff]
        %v1123 = vld [vmem:[%s340 + $0x18] sm:$0xff]
        %v1124 = vpack.c.bf16 %v843, %v841
        %v1125 = vpack.c.bf16 %v1021, %v1019
        %v1126 = vpack.c.bf16 %v848, %v846
        %v1127 = vpack.c.bf16 %v1026, %v1024
        %v1128 = vpack.c.bf16 %v853, %v851
        %v1129 = vpack.c.bf16 %v1031, %v1029
        %v1130 = vpack.c.bf16 %v858, %v856
        %v1131 = vpack.c.bf16 %v1036, %v1034
        %v1132 = vpack.c.bf16 %v863, %v861
        %v1133 = vpack.c.bf16 %v1041, %v1039
        %v1134 = vpack.c.bf16 %v868, %v866
        %v1135 = vpack.c.bf16 %v1046, %v1044
        %v1136 = vpack.c.bf16 %v873, %v871
        %v1137 = vpack.c.bf16 %v1051, %v1049
        %v1138 = vpack.c.bf16 %v878, %v876
        %v1139 = vpack.c.bf16 %v1056, %v1054
        %v1140 = vpack.c.bf16 %v883, %v881
        %v1141 = vpack.c.bf16 %v1061, %v1059
        %v1142 = vpack.c.bf16 %v888, %v886
        %v1143 = vpack.c.bf16 %v1066, %v1064
        %v1144 = vpack.c.bf16 %v893, %v891
        %v1145 = vpack.c.bf16 %v1071, %v1069
        %v1146 = vpack.c.bf16 %v898, %v896
        %v1147 = vpack.c.bf16 %v1076, %v1074
        %v1148 = vpack.c.bf16 %v903, %v901
        %v1149 = vpack.c.bf16 %v1081, %v1079
        %v1150 = vpack.c.bf16 %v908, %v906
        %v1151 = vpack.c.bf16 %v1086, %v1084
        %v1152 = vpack.c.bf16 %v913, %v911
        %v1153 = vpack.c.bf16 %v1091, %v1089
        %v1154 = vpack.c.bf16 %v918, %v916
        %v1155 = vpack.c.bf16 %v1096, %v1094
        %1156 = vmatpush.bf16.msra.mxu0 %v1138
        %1157 = vmatpush.bf16.msra.mxu0 %v1136
        %1158 = vmatpush.bf16.msra.mxu0 %v1134
        %1159 = vmatpush.bf16.msra.mxu0 %v1132
        %1160 = vmatpush.bf16.msra.mxu0 %v1130
        %1161 = vmatpush.bf16.msra.mxu0 %v1128
        %1162 = vmatpush.bf16.msra.mxu0 %v1126
        %1163 = vmatpush.bf16.msra.mxu0 %v1124
        %1164 = vmatmul.bf16.gmra.mxu0 %v1118
        %v1165 = vpop.f32.mrf.mxu0
        %v1166 = vadd.f32 0.0, %v1165
        %v1167 = vpop.f32.mrf.mxu0
        %v1168 = vadd.f32 0.0, %v1167
        %1169 = vdwg.mxu0
        %1170 = vmatpush.bf16.msra.mxu0 %v1154
        %1171 = vmatpush.bf16.msra.mxu0 %v1152
        %1172 = vmatpush.bf16.msra.mxu0 %v1150
        %1173 = vmatpush.bf16.msra.mxu0 %v1148
        %1174 = vmatpush.bf16.msra.mxu0 %v1146
        %1175 = vmatpush.bf16.msra.mxu0 %v1144
        %1176 = vmatpush.bf16.msra.mxu0 %v1142
        %1177 = vmatpush.bf16.msra.mxu0 %v1140
        %1178 = vmatmul.bf16.gmra.mxu0 %v1119
        %v1179 = vpop.f32.mrf.mxu0
        %v1180 = vadd.f32 %v1166, %v1179
        %v1181 = vpop.f32.mrf.mxu0
        %v1182 = vadd.f32 %v1168, %v1181
        %1183 = vdwg.mxu0
        %1184 = vmatpush.bf16.msra.mxu0 %v1139
        %1185 = vmatpush.bf16.msra.mxu0 %v1137
        %1186 = vmatpush.bf16.msra.mxu0 %v1135
        %1187 = vmatpush.bf16.msra.mxu0 %v1133
        %1188 = vmatpush.bf16.msra.mxu0 %v1131
        %1189 = vmatpush.bf16.msra.mxu0 %v1129
        %1190 = vmatpush.bf16.msra.mxu0 %v1127
        %1191 = vmatpush.bf16.msra.mxu0 %v1125
        %1192 = vmatmul.bf16.gmra.mxu0 %v1118
        %v1193 = vpop.f32.mrf.mxu0
        %v1194 = vadd.f32 0.0, %v1193
        %v1195 = vpop.f32.mrf.mxu0
        %v1196 = vadd.f32 0.0, %v1195
        %1197 = vdwg.mxu0
        %1198 = vmatpush.bf16.msra.mxu0 %v1155
        %1199 = vmatpush.bf16.msra.mxu0 %v1153
        %1200 = vmatpush.bf16.msra.mxu0 %v1151
        %1201 = vmatpush.bf16.msra.mxu0 %v1149
        %1202 = vmatpush.bf16.msra.mxu0 %v1147
        %1203 = vmatpush.bf16.msra.mxu0 %v1145
        %1204 = vmatpush.bf16.msra.mxu0 %v1143
        %1205 = vmatpush.bf16.msra.mxu0 %v1141
        %1206 = vmatmul.bf16.gmra.mxu0 %v1119
        %v1207 = vpop.f32.mrf.mxu0
        %v1208 = vadd.f32 %v1194, %v1207
        %v1209 = vpop.f32.mrf.mxu0
        %v1210 = vadd.f32 %v1196, %v1209
        %1211 = vdwg.mxu0
        %v1212 = vadd.f32 %v1120, %v1180
        %v1213 = vadd.f32 %v1121, %v1208
        %v1214 = vadd.f32 %v1122, %v1182
        %v1215 = vadd.f32 %v1123, %v1210
        %1216 = vst [vmem:[%s340] sm:$0xff] %v1212
        %1217 = vst [vmem:[%s340 + $0x8] sm:$0xff] %v1213
        %1218 = vst [vmem:[%s340 + $0x10] sm:$0xff] %v1214
        %1219 = vst [vmem:[%s340 + $0x18] sm:$0xff] %v1215
        %s1220 = sand.u32 %s156, 1
        %s1221 = scalar_lea.sflag [#allocation4], %s1220
        %s1222 = sand.u32 %s156, 1
        %s1223 = smul.addr %s1222, 32
        %s1224 = scalar_lea.vmem [#allocation10], %s1223
        // Predicated region
        $region57: #{tpu_custom_call.1} parent=35 // pred_check
          %p1225 = pneg %p166
        $region58: #{tpu_custom_call.1} parent=35 // pred_check_branch
          %1227 = sbr.rel (%p1225) target = $region60
        $region59: #{tpu_custom_call.1} parent=35 // pred_region
          %1229 = vsyncadd %s1221, 0
          %s1230 = smul.addr %s29, 4
          %s1231 = smul.addr %s1230, 8
          %s1232 = scalar_lea.hbm %s4, %s1231
          %s1233 = sshll.u32 %s1224, 4
          %s1234 = int_to_ptr.vmem [resolvable:$true] %s1233
          %s1235 = sshll.u32 %s1232, 4
          %s1236 = int_to_ptr.hbm [resolvable:$true] %s1235
          %1241 = dma.vmem_to_hbm [thread:$0]  %s1234, 512, %s1236, %s1221, 256, 256, 16
        $region60: #{tpu_custom_call.1} parent=35 // pred_fallthru
          _
      $region36: #{tpu_custom_call.1} parent=5 // pred_fallthru
        _
      %p1242 = scmp.le.s32.totalorder 2, %s20
      // Predicated region
      $region61: #{tpu_custom_call.1} parent=5 // pred_check
        %p1243 = pneg %p1242
      $region62: #{tpu_custom_call.1} parent=5 // pred_check_branch
        %1245 = sbr.rel (%p1243) target = $region64
      $region63: #{tpu_custom_call.1} parent=5 // pred_region
        %s1246 = ssub.s32 %s20, 2
        // Predicated region
        $region65: #{tpu_custom_call.1} parent=63 // pred_check
          %p1247 = pneg %p172
        $region66: #{tpu_custom_call.1} parent=63 // pred_check_branch
          %1249 = sbr.rel (%p1247) target = $region68
        $region67: #{tpu_custom_call.1} parent=63 // pred_region
          %s1250 = sand.u32 %s157, 1
          %s1251 = scalar_lea.sflag [#allocation4], %s1250
          %s1252 = sand.u32 %s157, 1
          %s1253 = smul.addr %s1252, 32
          %s1254 = scalar_lea.vmem [#allocation10], %s1253
          %1256 = dma.done %s1251, 512
        $region68: #{tpu_custom_call.1} parent=63 // pred_fallthru
          _
      $region64: #{tpu_custom_call.1} parent=5 // pred_fallthru
        _
    $region6: #{tpu_custom_call.1} parent=1 // loop_footer
      %s24 = sadd.s32 1, %s20
    $region7: #{tpu_custom_call.1} parent=1 // loop_footer_branch
      %19 = sbr.rel target = $region3
    $region8: #{tpu_custom_call.1} parent=1 // loop_exit
      _
    %1257 = vsyncpa [#allocation3], 1
    %s1258 = scalar_lea.sflag [#allocation3], 1
    %1259 = vsyncpa %s1258, 1
    %1260 = vsyncpa [#allocation6], 1
    %s1261 = scalar_lea.sflag [#allocation6], 1
    %1262 = vsyncpa %s1261, 1
    %1263 = vsyncpa [#allocation9], 1
    %1264 = vsyncpa [#allocation4], 1
    %s1265 = scalar_lea.sflag [#allocation4], 1
    %1266 = vsyncpa %s1265, 1

</llo_original>
